<compile_context>
chip_gen: v5e
topology: v5e:2x2
jax: 0.10.0
libtpu: 0.0.40
codegen_flags: <defaults>
</compile_context>

<pallas_src>
import jax
import jax.numpy as jnp
from jax.experimental import pallas as pl
from jax.experimental.pallas import tpu as pltpu

NUM_L1 = 20          # hidden units (fixed by the module)
NUM_CLASSES = 2      # len(digits), digits = (4, 9)
HID_PAD = 128        # lane-dense padded hidden width
CLS_PAD = 128        # lane-dense padded class width (internal only; HBM output is 2-wide)
_NEG_BIG = -1e30     # "minus infinity" bias for padded class lanes


def _round_up(n, m):
    return ((n + m - 1) // m) * m


def _mlp_softmax_kernel(x_ref, w1_ref, b1_ref, w2_ref, b2_ref, o_ref):
    # ---- Linear 1: cast x to bf16 in-kernel (no extra HBM pass), f32 MXU accumulation ----
    x_bf = x_ref[...].astype(jnp.bfloat16)                       # (TB, F)
    h = jnp.dot(x_bf, w1_ref[...], preferred_element_type=jnp.float32)
    h = jnp.maximum(h + b1_ref[...], 0.0)                        # (TB, 128) lane-dense f32

    # ---- Linear 2: bf16 operands (padded hidden cols are exact zeros), f32 accumulation ----
    logits = jnp.dot(h.astype(jnp.bfloat16), w2_ref[...],
                     preferred_element_type=jnp.float32)
    logits = logits + b2_ref[...]                                # padded class lanes -> -1e30

    # ---- stable softmax over classes; padded lanes vanish exactly (exp(-1e30 - m) == 0) ----
    m = jnp.max(logits, axis=1, keepdims=True)
    e = jnp.exp(logits - m)
    denom = jnp.sum(e, axis=1, keepdims=True)
    inv = pl.reciprocal(denom, approx=True)                      # EUP, off the VPU path
    # Store only the 2 real class columns (narrow out block; OOB tail rows are dropped).
    o_ref[...] = (e[:, :NUM_CLASSES] * inv).astype(o_ref.dtype)


def net_forward(x, w1, b1, w2, b2, *, tile_b=1024):
    """Forward pass of Net.

    x : (B, F) float32
    w1: (NUM_L1, F), b1: (NUM_L1,)              -- torch nn.Linear layout (out, in)
    w2: (NUM_CLASSES, NUM_L1), b2: (NUM_CLASSES,)
    Returns (B, NUM_CLASSES) float32 softmax probabilities.
    """
    B, F = x.shape
    assert tile_b % 16 == 0, "tile_b must be a multiple of 16 (bf16 packs 2 rows/sublane)"

    # ---- lane-dense / bf16 parameter packing (tiny, resident across all grid steps) ----
    w1p = jnp.zeros((F, HID_PAD), jnp.bfloat16).at[:, :NUM_L1].set(
        w1.T.astype(jnp.bfloat16))
    b1p = jnp.zeros((1, HID_PAD), jnp.float32).at[:, :NUM_L1].set(
        b1.astype(jnp.float32))
    w2p = jnp.zeros((HID_PAD, CLS_PAD), jnp.bfloat16).at[:NUM_L1, :NUM_CLASSES].set(
        w2.T.astype(jnp.bfloat16))
    b2p = jnp.full((1, CLS_PAD), _NEG_BIG, jnp.float32).at[:, :NUM_CLASSES].set(
        b2.astype(jnp.float32))

    # ---- batch tiling: no padding of x; ensure >=2 grid steps when B allows it (v7x) ----
    tb = min(tile_b, max(16, _round_up(pl.cdiv(B, 2), 16)))
    grid_steps = pl.cdiv(B, tb)

    # VMEM budget: double-buffered f32 x tile + a few (tb,128) f32 temporaries + params.
    # Capped at 64 MiB; on v7x keep tile_b modest (<= ~2048) so this stays well under 48 MiB.
    x_tile_bytes = tb * F * 4
    tmp_bytes = 8 * tb * 128 * 4
    param_bytes = 2 * (F * HID_PAD * 2 + HID_PAD * CLS_PAD * 2 + 2 * 128 * 4)
    vmem_limit = max(32 << 20,
                     min(64 << 20, 2 * x_tile_bytes + tmp_bytes + param_bytes + (2 << 20)))

    out = pl.pallas_call(
        _mlp_softmax_kernel,
        out_shape=jax.ShapeDtypeStruct((B, NUM_CLASSES), jnp.float32),
        grid=(grid_steps,),
        in_specs=[
            pl.BlockSpec((tb, F), lambda i: (i, 0)),             # x tile (f32, cast in-kernel)
            pl.BlockSpec((F, HID_PAD), lambda i: (0, 0)),        # W1 (bf16, resident)
            pl.BlockSpec((1, HID_PAD), lambda i: (0, 0)),        # b1 (f32)
            pl.BlockSpec((HID_PAD, CLS_PAD), lambda i: (0, 0)),  # W2 (bf16)
            pl.BlockSpec((1, CLS_PAD), lambda i: (0, 0)),        # b2 (f32, -1e30 padding)
        ],
        out_specs=pl.BlockSpec((tb, NUM_CLASSES), lambda i: (i, 0)),
        compiler_params=pltpu.CompilerParams(
            dimension_semantics=("parallel",),   # shard batch grid across v7x's 2 TCs
            vmem_limit_bytes=vmem_limit,
        ),
    )(x, w1p, b1p, w2p, b2p)

    return out


if __name__ == "__main__":
    key = jax.random.PRNGKey(0)
    kx, k1, k2, k3, k4 = jax.random.split(key, 5)

    batch = 40               # not a multiple of the test tile -> exercises the ragged tail
    num_features = 784       # flattened 28x28 MNIST

    x = jax.random.normal(kx, (batch, num_features), jnp.float32)
    # torch nn.Linear layout: weight (out_features, in_features), bias (out_features,)
    w1 = jax.random.normal(k1, (NUM_L1, num_features), jnp.float32) * 0.05
    b1 = jax.random.normal(k2, (NUM_L1,), jnp.float32) * 0.05
    w2 = jax.random.normal(k3, (NUM_CLASSES, NUM_L1), jnp.float32) * 0.05
    b2 = jax.random.normal(k4, (NUM_CLASSES,), jnp.float32) * 0.05

    # Small tile so the test exercises a multi-step grid with a partial trailing block
    # (40 rows -> 3 steps of 16 with an 8-row ragged tail).
    out = net_forward(x, w1, b1, w2, b2, tile_b=16)
    out = jax.block_until_ready(out)

    # Pure-JAX reference using the same bf16 contractions (f32 accumulation, f32 softmax).
    h_ref = jnp.maximum(
        jnp.dot(x.astype(jnp.bfloat16), w1.T.astype(jnp.bfloat16),
                preferred_element_type=jnp.float32) + b1[None, :], 0.0)
    logits_ref = jnp.dot(h_ref.astype(jnp.bfloat16), w2.T.astype(jnp.bfloat16),
                         preferred_element_type=jnp.float32) + b2[None, :]
    ref = jax.nn.softmax(logits_ref, axis=1)

    assert out.shape == (batch, NUM_CLASSES)
    assert bool(jnp.all(jnp.isfinite(out)))
    # Slightly relaxed tolerances: approx reciprocal in the kernel's softmax denominator.
    assert jnp.allclose(jnp.sum(out, axis=1), 1.0, atol=5e-3)
    assert jnp.allclose(out, ref, atol=5e-3, rtol=5e-3)

    print("KERNEL_OK")
</pallas_src>

<mosaic_0001>
module attributes {stable_mosaic.version = 11 : i64} {
  func.func @_mlp_softmax_kernel(%arg0: i32, %arg1: memref<16x784xf32, #tpu.memory_space<vmem>>, %arg2: memref<784x128xbf16, #tpu.memory_space<vmem>>, %arg3: memref<1x128xf32, #tpu.memory_space<vmem>>, %arg4: memref<128x128xbf16, #tpu.memory_space<vmem>>, %arg5: memref<1x128xf32, #tpu.memory_space<vmem>>, %arg6: memref<16x2xf32, #tpu.memory_space<vmem>>) attributes {dimension_semantics = [#tpu.dimension_semantics<parallel>], iteration_bounds = array<i64: 3>, scalar_prefetch = 0 : i64, scratch_operands = 0 : i64, tpu.core_type = #tpu.core_type<tc>, window_params = [{transform_indices = @transform_0, window_bounds = array<i64: 16, 784>}, {pipeline_mode = #tpu.pipeline_mode<synchronous>, transform_indices = @transform_1, window_bounds = array<i64: 784, 128>}, {pipeline_mode = #tpu.pipeline_mode<synchronous>, transform_indices = @transform_2, window_bounds = array<i64: 1, 128>}, {pipeline_mode = #tpu.pipeline_mode<synchronous>, transform_indices = @transform_3, window_bounds = array<i64: 128, 128>}, {pipeline_mode = #tpu.pipeline_mode<synchronous>, transform_indices = @transform_4, window_bounds = array<i64: 1, 128>}, {transform_indices = @transform_5, window_bounds = array<i64: 16, 2>}]} {
    %c0 = arith.constant 0 : index
    %c0_0 = arith.constant 0 : index
    %0 = vector.load %arg1[%c0, %c0_0] : memref<16x784xf32, #tpu.memory_space<vmem>>, vector<16x784xf32>
    %1 = arith.truncf %0 : vector<16x784xf32> to vector<16x784xbf16>
    %c0_1 = arith.constant 0 : index
    %c0_2 = arith.constant 0 : index
    %2 = vector.load %arg2[%c0_1, %c0_2] : memref<784x128xbf16, #tpu.memory_space<vmem>>, vector<784x128xbf16>
    %cst = arith.constant dense<0.000000e+00> : vector<16x128xf32>
    %3 = tpu.matmul %1, %2, %cst {dimension_numbers = #tpu.dot_dimension_numbers<[1], [0], [0], [1], [0, 0, 1, 1], [], []>} : vector<16x784xbf16>, vector<784x128xbf16>, vector<16x128xf32> -> vector<16x128xf32>
    %c0_3 = arith.constant 0 : index
    %c0_4 = arith.constant 0 : index
    %4 = vector.load %arg3[%c0_3, %c0_4] : memref<1x128xf32, #tpu.memory_space<vmem>>, vector<1x128xf32>
    %5 = vector.broadcast %4 : vector<1x128xf32> to vector<16x128xf32>
    %6 = arith.addf %3, %5 : vector<16x128xf32>
    %cst_5 = arith.constant 0.000000e+00 : f32
    %7 = vector.broadcast %cst_5 : f32 to vector<16x128xf32>
    %8 = arith.maximumf %6, %7 : vector<16x128xf32>
    %9 = arith.truncf %8 : vector<16x128xf32> to vector<16x128xbf16>
    %c0_6 = arith.constant 0 : index
    %c0_7 = arith.constant 0 : index
    %10 = vector.load %arg4[%c0_6, %c0_7] : memref<128x128xbf16, #tpu.memory_space<vmem>>, vector<128x128xbf16>
    %cst_8 = arith.constant dense<0.000000e+00> : vector<16x128xf32>
    %11 = tpu.matmul %9, %10, %cst_8 {dimension_numbers = #tpu.dot_dimension_numbers<[1], [0], [0], [1], [0, 0, 1, 1], [], []>} : vector<16x128xbf16>, vector<128x128xbf16>, vector<16x128xf32> -> vector<16x128xf32>
    %c0_9 = arith.constant 0 : index
    %c0_10 = arith.constant 0 : index
    %12 = vector.load %arg5[%c0_9, %c0_10] : memref<1x128xf32, #tpu.memory_space<vmem>>, vector<1x128xf32>
    %13 = vector.broadcast %12 : vector<1x128xf32> to vector<16x128xf32>
    %14 = arith.addf %11, %13 : vector<16x128xf32>
    %cst_11 = arith.constant dense<0xFF800000> : vector<16xf32>
    %15 = vector.multi_reduction <maximumf>, %14, %cst_11 [1] : vector<16x128xf32> to vector<16xf32>
    %16 = vector.shape_cast %15 : vector<16xf32> to vector<16x1xf32>
    %17 = vector.broadcast %16 : vector<16x1xf32> to vector<16x128xf32>
    %18 = arith.subf %14, %17 : vector<16x128xf32>
    %19 = math.exp %18 : vector<16x128xf32>
    %cst_12 = arith.constant dense<0.000000e+00> : vector<16xf32>
    %20 = vector.multi_reduction <add>, %19, %cst_12 [1] : vector<16x128xf32> to vector<16xf32>
    %21 = vector.shape_cast %20 : vector<16xf32> to vector<16x1xf32>
    %22 = tpu.reciprocal %21 {approx = true} : vector<16x1xf32> -> vector<16x1xf32>
    %23 = vector.extract_strided_slice %19 {offsets = [0, 0], sizes = [16, 2], strides = [1, 1]} : vector<16x128xf32> to vector<16x2xf32>
    %24 = vector.broadcast %22 : vector<16x1xf32> to vector<16x2xf32>
    %25 = arith.mulf %23, %24 : vector<16x2xf32>
    %c0_13 = arith.constant 0 : index
    %c0_14 = arith.constant 0 : index
    %26 = vector.load %arg6[%c0_13, %c0_14] : memref<16x2xf32, #tpu.memory_space<vmem>>, vector<16x2xf32>
    tpu.vector_store %arg6[%c0_13, %c0_14], %25 {strides = array<i32>} : memref<16x2xf32, #tpu.memory_space<vmem>>, vector<16x2xf32>,
    return
  }
  func.func @transform_0(%arg0: i32) -> (i32, i32) {
    %c0_i32 = arith.constant 0 : i32
    %c0_i32_0 = arith.constant 0 : i32
    return %arg0, %c0_i32 : i32, i32
  }
  func.func @transform_1(%arg0: i32) -> (i32, i32) {
    %c0_i32 = arith.constant 0 : i32
    %c0_i32_0 = arith.constant 0 : i32
    %c0_i32_1 = arith.constant 0 : i32
    return %c0_i32, %c0_i32_0 : i32, i32
  }
  func.func @transform_2(%arg0: i32) -> (i32, i32) {
    %c0_i32 = arith.constant 0 : i32
    %c0_i32_0 = arith.constant 0 : i32
    %c0_i32_1 = arith.constant 0 : i32
    return %c0_i32, %c0_i32_0 : i32, i32
  }
  func.func @transform_3(%arg0: i32) -> (i32, i32) {
    %c0_i32 = arith.constant 0 : i32
    %c0_i32_0 = arith.constant 0 : i32
    %c0_i32_1 = arith.constant 0 : i32
    return %c0_i32, %c0_i32_0 : i32, i32
  }
  func.func @transform_4(%arg0: i32) -> (i32, i32) {
    %c0_i32 = arith.constant 0 : i32
    %c0_i32_0 = arith.constant 0 : i32
    %c0_i32_1 = arith.constant 0 : i32
    return %c0_i32, %c0_i32_0 : i32, i32
  }
  func.func @transform_5(%arg0: i32) -> (i32, i32) {
    %c0_i32 = arith.constant 0 : i32
    %c0_i32_0 = arith.constant 0 : i32
    return %arg0, %c0_i32 : i32, i32
  }
}

</mosaic_0001>

<llo_original>
// kernel: tpu_custom_call.1
$region0: #{tpu_custom_call.1}
  #allocation0 [shape = 'u32[]', space=smem, size = 0x4, offset = 0x4, fixed_abs, tag = 'smem constant byte address 0x4 - core index']
  #allocation1 [shape = 'u32[72,128]{1,0:T(1,128)}', space=vmem, size = 0x9000, scoped, tag = 'internal scratch']
  %s0 = inlined_call_operand.hbm [shape: f32[40,784], index: 0, kind: input, shape index: {}]
  %s1 = inlined_call_operand.hbm [shape: bf16[784,128], index: 1, kind: input, shape index: {}]
  %s2 = inlined_call_operand.vmem [shape: f32[1,128], index: 2, kind: input, shape index: {}]
  %s3 = inlined_call_operand.hbm [shape: bf16[128,128], index: 3, kind: input, shape index: {}]
  %s4 = inlined_call_operand.vmem [shape: f32[1,128], index: 4, kind: input, shape index: {}]
  %s5 = inlined_call_operand.vmem [shape: f32[40,2], index: 5, kind: output, shape index: {}]
  %s6 = sld [smem:[#allocation0]]
  $region113: #{tpu_custom_call.1} parent=0
    _
  %s8 = ssub.s32 1, %s6
  %s9 = scalar_select 0, %s8, %s6
  $region1: #{tpu_custom_call.1} parent=0
    #allocation2 [shape = 'u8[114688]{0}', space=vmem, size = 0x1c000, scoped, tag = 'input window, operand 0']
    #allocation3 [shape = 's32[2]{0}', space=sflag, size = 0x8, scoped, tag = 'scoped memory for tpu_custom_call.1']
    #allocation4 [shape = 'u8[200704]{0}', space=vmem, size = 0x31000, scoped, tag = 'input window, operand 1, single buffered']
    #allocation5 [shape = 's32[1]{0}', space=sflag, size = 0x4, scoped, tag = 'scoped memory for tpu_custom_call.1']
    #allocation6 [shape = 'u8[32768]{0}', space=vmem, size = 0x8000, scoped, tag = 'input window, operand 3, single buffered']
    #allocation7 [shape = 'u8[16384]{0}', space=vmem, size = 0x4000, scoped, tag = 'output window, operand 0']
    %10 = vsyncpa [#allocation3], 0
    %s11 = scalar_lea.sflag [#allocation3], 1
    %12 = vsyncpa %s11, 0
    %13 = vsyncpa [#allocation5], 0
    loop: start=0, step=1, limit=5
    $region2: #{tpu_custom_call.1} parent=1 // loop_pre_header
      _
    $region3: #{tpu_custom_call.1} parent=1 // loop_header
      %s15 = sphi 0, %s19
      %p16 = scmp.ge.s32.totalorder %s15, 5
      %s25 = sphi 0, %s27
      %s28 = sphi 0, %s25
      %s29 = sphi 0, %s28
      %s45 = sphi 0, %s29
      %s49 = sphi 0, %s49
      %s51 = sphi 0, %s49
      %s52 = sphi 0, %s51
      %s66 = sphi 0, %s52
      %s70 = sphi 0, %s70
      %s72 = sphi 0, %s70
      %s73 = sphi 0, %s72
      %s87 = sphi 0, %s73
      %s91 = sphi 0, %s91
      %s93 = sphi 0, %s91
      %s94 = sphi 0, %s93
      %s108 = sphi 0, %s94
      %s112 = sphi 0, %s112
      %s114 = sphi 0, %s112
      %s115 = sphi 0, %s114
      %s129 = sphi 0, %s115
      %s135 = sphi 0, %s137
      %s138 = sphi 0, %s135
      %s139 = sphi 0, %s138
      %s155 = sphi 0, %s139
    $region4: #{tpu_custom_call.1} parent=1 // loop_header_branch
      %18 = sbr.rel (%p16) target = $region8
    $region5: #{tpu_custom_call.1} parent=1 // loop_body
      %s20 = ssub.s32 %s15, 1
      %s21 = ssub.s32 %s15, 2
      %s22 = sadd.s32 %s15, 1
      %s23 = ssub.s32 %s15, %s22
      %p24 = scmp.eq.s32.totalorder %s23, 0
      %s26 = sadd.s32 %s25, 1
      %s27 = scalar_select %p24, %s25, %s26
      %p30 = pneg %p24
      %p31 = scmp.eq.s32.totalorder %s15, 2
      %p32 = por %p30, %p31
      %p33 = scmp.ne.s32.totalorder %s25, %s28
      %p34 = scmp.eq.s32.totalorder %s15, 0
      %p35 = por %p33, %p34
      %p36 = scmp.ne.s32.totalorder %s25, %s28
      %p37 = scmp.eq.s32.totalorder %s20, 2
      %p38 = por %p36, %p37
      %p39 = scmp.ne.s32.totalorder %s28, %s29
      %p40 = scmp.eq.s32.totalorder %s20, 0
      %p41 = por %p39, %p40
      %p42 = scmp.ne.s32.totalorder %s28, %s29
      %p43 = scmp.eq.s32.totalorder %s21, 2
      %p44 = por %p42, %p43
      %p46 = scmp.ne.s32.totalorder %s29, %s45
      %p47 = scmp.eq.s32.totalorder %s21, 0
      %p48 = por %p46, %p47
      %s50 = sadd.s32 %s49, 1
      %p53 = scmp.eq.s32.totalorder %s15, 2
      %p54 = scmp.ne.s32.totalorder %s49, %s51
      %p55 = scmp.eq.s32.totalorder %s15, 0
      %p56 = por %p54, %p55
      %p57 = scmp.ne.s32.totalorder %s49, %s51
      %p58 = scmp.eq.s32.totalorder %s20, 2
      %p59 = por %p57, %p58
      %p60 = scmp.ne.s32.totalorder %s51, %s52
      %p61 = scmp.eq.s32.totalorder %s20, 0
      %p62 = por %p60, %p61
      %p63 = scmp.ne.s32.totalorder %s51, %s52
      %p64 = scmp.eq.s32.totalorder %s21, 2
      %p65 = por %p63, %p64
      %p67 = scmp.ne.s32.totalorder %s52, %s66
      %p68 = scmp.eq.s32.totalorder %s21, 0
      %p69 = por %p67, %p68
      %s71 = sadd.s32 %s70, 1
      %p74 = scmp.eq.s32.totalorder %s15, 2
      %p75 = scmp.ne.s32.totalorder %s70, %s72
      %p76 = scmp.eq.s32.totalorder %s15, 0
      %p77 = por %p75, %p76
      %p78 = scmp.ne.s32.totalorder %s70, %s72
      %p79 = scmp.eq.s32.totalorder %s20, 2
      %p80 = por %p78, %p79
      %p81 = scmp.ne.s32.totalorder %s72, %s73
      %p82 = scmp.eq.s32.totalorder %s20, 0
      %p83 = por %p81, %p82
      %p84 = scmp.ne.s32.totalorder %s72, %s73
      %p85 = scmp.eq.s32.totalorder %s21, 2
      %p86 = por %p84, %p85
      %p88 = scmp.ne.s32.totalorder %s73, %s87
      %p89 = scmp.eq.s32.totalorder %s21, 0
      %p90 = por %p88, %p89
      %s92 = sadd.s32 %s91, 1
      %p95 = scmp.eq.s32.totalorder %s15, 2
      %p96 = scmp.ne.s32.totalorder %s91, %s93
      %p97 = scmp.eq.s32.totalorder %s15, 0
      %p98 = por %p96, %p97
      %p99 = scmp.ne.s32.totalorder %s91, %s93
      %p100 = scmp.eq.s32.totalorder %s20, 2
      %p101 = por %p99, %p100
      %p102 = scmp.ne.s32.totalorder %s93, %s94
      %p103 = scmp.eq.s32.totalorder %s20, 0
      %p104 = por %p102, %p103
      %p105 = scmp.ne.s32.totalorder %s93, %s94
      %p106 = scmp.eq.s32.totalorder %s21, 2
      %p107 = por %p105, %p106
      %p109 = scmp.ne.s32.totalorder %s94, %s108
      %p110 = scmp.eq.s32.totalorder %s21, 0
      %p111 = por %p109, %p110
      %s113 = sadd.s32 %s112, 1
      %p116 = scmp.eq.s32.totalorder %s15, 2
      %p117 = scmp.ne.s32.totalorder %s112, %s114
      %p118 = scmp.eq.s32.totalorder %s15, 0
      %p119 = por %p117, %p118
      %p120 = scmp.ne.s32.totalorder %s112, %s114
      %p121 = scmp.eq.s32.totalorder %s20, 2
      %p122 = por %p120, %p121
      %p123 = scmp.ne.s32.totalorder %s114, %s115
      %p124 = scmp.eq.s32.totalorder %s20, 0
      %p125 = por %p123, %p124
      %p126 = scmp.ne.s32.totalorder %s114, %s115
      %p127 = scmp.eq.s32.totalorder %s21, 2
      %p128 = por %p126, %p127
      %p130 = scmp.ne.s32.totalorder %s115, %s129
      %p131 = scmp.eq.s32.totalorder %s21, 0
      %p132 = por %p130, %p131
      %s133 = ssub.s32 %s15, %s22
      %p134 = scmp.eq.s32.totalorder %s133, 0
      %s136 = sadd.s32 %s135, 1
      %s137 = scalar_select %p134, %s135, %s136
      %p140 = pneg %p134
      %p141 = scmp.eq.s32.totalorder %s15, 2
      %p142 = por %p140, %p141
      %p143 = scmp.ne.s32.totalorder %s135, %s138
      %p144 = scmp.eq.s32.totalorder %s15, 0
      %p145 = por %p143, %p144
      %p146 = scmp.ne.s32.totalorder %s135, %s138
      %p147 = scmp.eq.s32.totalorder %s20, 2
      %p148 = por %p146, %p147
      %p149 = scmp.ne.s32.totalorder %s138, %s139
      %p150 = scmp.eq.s32.totalorder %s20, 0
      %p151 = por %p149, %p150
      %p152 = scmp.ne.s32.totalorder %s138, %s139
      %p153 = scmp.eq.s32.totalorder %s21, 2
      %p154 = por %p152, %p153
      %p156 = scmp.ne.s32.totalorder %s139, %s155
      %p157 = scmp.eq.s32.totalorder %s21, 0
      %p158 = por %p156, %p157
      %p159 = scmp.le.s32.totalorder 1, %s15
      %p160 = scmp.lt.s32.totalorder %s15, 4
      %p161 = pnand %p159, %p160
      %p162 = pneg %p161
      // Predicated region
      $region9: #{tpu_custom_call.1} parent=5 // pred_check
        _
      $region10: #{tpu_custom_call.1} parent=5 // pred_check_branch
        %164 = sbr.rel (%p161) target = $region12
      $region11: #{tpu_custom_call.1} parent=5 // pred_region
        %s165 = ssub.s32 %s15, 1
        // Predicated region
        $region13: #{tpu_custom_call.1} parent=11 // pred_check
          %p166 = pneg %p62
        $region14: #{tpu_custom_call.1} parent=11 // pred_check_branch
          %168 = sbr.rel (%p166) target = $region16
        $region15: #{tpu_custom_call.1} parent=11 // pred_region
          %170 = vsyncadd [#allocation5], 0
          %s171 = sshll.u32 %s1, 4
          %s172 = int_to_ptr.hbm [resolvable:$true] %s171
          %s173 = sshll.u32 [#allocation4], 4
          %s174 = int_to_ptr.vmem [resolvable:$true] %s173
          %179 = dma.hbm_to_vmem [thread:$0]  %s172, 6272, %s174, [#allocation5], 64, 64, 4
        $region16: #{tpu_custom_call.1} parent=11 // pred_fallthru
          _
        // Predicated region
        $region17: #{tpu_custom_call.1} parent=11 // pred_check
          %p180 = pneg %p83
        $region18: #{tpu_custom_call.1} parent=11 // pred_check_branch
          %182 = sbr.rel (%p180) target = $region20
        $region19: #{tpu_custom_call.1} parent=11 // pred_region
          _
        $region20: #{tpu_custom_call.1} parent=11 // pred_fallthru
          _
        // Predicated region
        $region21: #{tpu_custom_call.1} parent=11 // pred_check
          %p183 = pneg %p104
        $region22: #{tpu_custom_call.1} parent=11 // pred_check_branch
          %185 = sbr.rel (%p183) target = $region24
        $region23: #{tpu_custom_call.1} parent=11 // pred_region
          %187 = vsyncadd [#allocation5], 0
          %s188 = sshll.u32 %s3, 4
          %s189 = int_to_ptr.hbm [resolvable:$true] %s188
          %s190 = sshll.u32 [#allocation6], 4
          %s191 = int_to_ptr.vmem [resolvable:$true] %s190
          %196 = dma.hbm_to_vmem [thread:$0]  %s189, 1024, %s191, [#allocation5], 64, 64, 4
        $region24: #{tpu_custom_call.1} parent=11 // pred_fallthru
          _
        // Predicated region
        $region25: #{tpu_custom_call.1} parent=11 // pred_check
          %p197 = pneg %p125
        $region26: #{tpu_custom_call.1} parent=11 // pred_check_branch
          %199 = sbr.rel (%p197) target = $region28
        $region27: #{tpu_custom_call.1} parent=11 // pred_region
          _
        $region28: #{tpu_custom_call.1} parent=11 // pred_fallthru
          _
      $region12: #{tpu_custom_call.1} parent=5 // pred_fallthru
        _
      %p200 = scmp.lt.s32.totalorder %s15, 3
      // Predicated region
      $region29: #{tpu_custom_call.1} parent=5 // pred_check
        %p201 = pneg %p200
      $region30: #{tpu_custom_call.1} parent=5 // pred_check_branch
        %203 = sbr.rel (%p201) target = $region32
      $region31: #{tpu_custom_call.1} parent=5 // pred_region
        // Predicated region
        $region33: #{tpu_custom_call.1} parent=31 // pred_check
          %p204 = pneg %p35
        $region34: #{tpu_custom_call.1} parent=31 // pred_check_branch
          %206 = sbr.rel (%p204) target = $region36
        $region35: #{tpu_custom_call.1} parent=31 // pred_region
          %s207 = sand.u32 %s25, 1
          %s208 = scalar_lea.sflag [#allocation3], %s207
          %s209 = sand.u32 %s25, 1
          %s210 = smul.addr %s209, 112
          %s211 = scalar_lea.vmem [#allocation2], %s210
          %s212 = smul.u32 2, %s15
          %s213 = ssub.s32 5, %s212
          %p214 = scmp.lt.s32.totalorder %s213, 2
          %s215 = scalar_select %p214, %s213, 2
          %s216 = smul.u32 8, %s215
          %s217 = smul.u32 %s216, 7
          %s218 = ssub.s32 112, %s217
          %s219 = sshll.u32 %s218, 4
          %220 = vsyncadd %s208, %s219
          %p221 = scmp.ne.s32.totalorder 0, %s217
          %s222 = smul.addr %s212, 7
          %s223 = smul.addr %s222, 8
          %s224 = scalar_lea.hbm %s0, %s223
          %s225 = smul.u32 56, %s215
          %s226 = sshll.u32 %s224, 4
          %s227 = int_to_ptr.hbm [resolvable:$true] %s226
          %s228 = sshll.u32 %s211, 4
          %s229 = int_to_ptr.vmem [resolvable:$true] %s228
          %s230 = sshll.u32 %s225, 4
          %234 = dma.hbm_to_vmem [thread:$0]  (%p221), %s227, %s230, %s229, %s208, 896, 896, 56
        $region36: #{tpu_custom_call.1} parent=31 // pred_fallthru
          _
      $region32: #{tpu_custom_call.1} parent=5 // pred_fallthru
        _
      %p235 = scmp.le.s32.totalorder 1, %s15
      %p236 = scmp.lt.s32.totalorder %s15, 4
      %p237 = pnand %p235, %p236
      %p238 = pneg %p237
      // Predicated region
      $region37: #{tpu_custom_call.1} parent=5 // pred_check
        _
      $region38: #{tpu_custom_call.1} parent=5 // pred_check_branch
        %240 = sbr.rel (%p237) target = $region40
      $region39: #{tpu_custom_call.1} parent=5 // pred_region
        %s241 = ssub.s32 %s15, 1
        %s242 = sand.u32 %s28, 1
        %s243 = scalar_lea.sflag [#allocation3], %s242
        %s244 = sand.u32 %s28, 1
        %s245 = smul.addr %s244, 112
        %s246 = scalar_lea.vmem [#allocation2], %s245
        // Predicated region
        $region41: #{tpu_custom_call.1} parent=39 // pred_check
          %p247 = pneg %p41
        $region42: #{tpu_custom_call.1} parent=39 // pred_check_branch
          %249 = sbr.rel (%p247) target = $region44
        $region43: #{tpu_custom_call.1} parent=39 // pred_region
          %251 = dma.done %s243, 1792
        $region44: #{tpu_custom_call.1} parent=39 // pred_fallthru
          _
        // Predicated region
        $region45: #{tpu_custom_call.1} parent=39 // pred_check
          %p252 = pneg %p62
        $region46: #{tpu_custom_call.1} parent=39 // pred_check_branch
          %254 = sbr.rel (%p252) target = $region48
        $region47: #{tpu_custom_call.1} parent=39 // pred_region
          %256 = dma.done [#allocation5], 6272
        $region48: #{tpu_custom_call.1} parent=39 // pred_fallthru
          _
        // Predicated region
        $region49: #{tpu_custom_call.1} parent=39 // pred_check
          %p257 = pneg %p104
        $region50: #{tpu_custom_call.1} parent=39 // pred_check_branch
          %259 = sbr.rel (%p257) target = $region52
        $region51: #{tpu_custom_call.1} parent=39 // pred_region
          %261 = dma.done [#allocation5], 1024
        $region52: #{tpu_custom_call.1} parent=39 // pred_fallthru
          _
        %s262 = sand.u32 %s28, 1
        %s263 = scalar_lea.sflag [#allocation3], %s262
        %s264 = sand.u32 %s28, 1
        %s265 = smul.addr %s264, 112
        %s266 = scalar_lea.vmem [#allocation2], %s265
        %p267 = pneg %p41
        %p268 = pneg %p38
        %p269 = pneg %p62
        %p270 = pneg %p59
        %p271 = pneg %p83
        %p272 = pneg %p80
        %p273 = pneg %p104
        %p274 = pneg %p101
        %p275 = pneg %p125
        %p276 = pneg %p122
        %p277 = pneg %p151
        %p278 = pneg %p148
        %s279 = sand.u32 %s138, 1
        %s280 = sand.u32 %s138, 1
        %s281 = smul.addr %s280, 16
        %s282 = scalar_lea.vmem [#allocation7], %s281
        %s283 = smul.u32 2, %s20
        %s284 = ssub.s32 5, %s283
        %p285 = scmp.lt.s32.totalorder %s284, 2
        %s286 = scalar_select %p285, %s284, 2
        %s287 = smul.u32 8, %s286
        %s288 = smul.u32 %s287, 7
        %s289 = smul.u32 2, %s20
        %s290 = ssub.s32 5, %s289
        %p291 = scmp.lt.s32.totalorder %s290, 2
        %s292 = scalar_select %p291, %s290, 2
        %s293 = smul.u32 8, %s292
        %v295 = vld [vmem:[%s246] sm:$0xff]
        %v296 = vld [vmem:[%s246 + $0x8] sm:$0xff]
        %v297 = vld [vmem:[%s246 + $0x10] sm:$0xff]
        %v298 = vld [vmem:[%s246 + $0x18] sm:$0xff]
        %v299 = vld [vmem:[%s246 + $0x20] sm:$0xff]
        %v300 = vld [vmem:[%s246 + $0x28] sm:$0xff]
        %v301 = vld [vmem:[%s246 + $0x30] sm:$0xff]
        %v302 = vld [vmem:[%s246 + $0x38] sm:$0xff]
        %v303 = vld [vmem:[%s246 + $0x40] sm:$0xff]
        %v304 = vld [vmem:[%s246 + $0x48] sm:$0xff]
        %v305 = vld [vmem:[%s246 + $0x50] sm:$0xff]
        %v306 = vld [vmem:[%s246 + $0x58] sm:$0xff]
        %v307 = vld [vmem:[%s246 + $0x60] sm:$0xff]
        %v308 = vld [vmem:[%s246 + $0x68] sm:$0xff]
        %v309 = vpack.c.bf16 %v302, %v295
        %v310 = vpack.c.bf16 %v303, %v296
        %v311 = vpack.c.bf16 %v304, %v297
        %v312 = vpack.c.bf16 %v305, %v298
        %v313 = vpack.c.bf16 %v306, %v299
        %v314 = vpack.c.bf16 %v307, %v300
        %v315 = vpack.c.bf16 %v308, %v301
        %v316 = vld [vmem:[#allocation4] sm:$0xf]
        %v317 = vld [vmem:[#allocation4 + $0x4] sm:$0xf]
        %v318 = vld [vmem:[#allocation4 + $0x8] sm:$0xf]
        %v319 = vld [vmem:[#allocation4 + $0xc] sm:$0xf]
        %v320 = vld [vmem:[#allocation4 + $0x10] sm:$0xf]
        %v321 = vld [vmem:[#allocation4 + $0x14] sm:$0xf]
        %v322 = vld [vmem:[#allocation4 + $0x18] sm:$0xf]
        %v323 = vld [vmem:[#allocation4 + $0x1c] sm:$0xf]
        %v324 = vld [vmem:[#allocation4 + $0x20] sm:$0xf]
        %v325 = vld [vmem:[#allocation4 + $0x24] sm:$0xf]
        %v326 = vld [vmem:[#allocation4 + $0x28] sm:$0xf]
        %v327 = vld [vmem:[#allocation4 + $0x2c] sm:$0xf]
        %v328 = vld [vmem:[#allocation4 + $0x30] sm:$0xf]
        %v329 = vld [vmem:[#allocation4 + $0x34] sm:$0xf]
        %v330 = vld [vmem:[#allocation4 + $0x38] sm:$0xf]
        %v331 = vld [vmem:[#allocation4 + $0x3c] sm:$0xf]
        %v332 = vld [vmem:[#allocation4 + $0x40] sm:$0xf]
        %v333 = vld [vmem:[#allocation4 + $0x44] sm:$0xf]
        %v334 = vld [vmem:[#allocation4 + $0x48] sm:$0xf]
        %v335 = vld [vmem:[#allocation4 + $0x4c] sm:$0xf]
        %v336 = vld [vmem:[#allocation4 + $0x50] sm:$0xf]
        %v337 = vld [vmem:[#allocation4 + $0x54] sm:$0xf]
        %v338 = vld [vmem:[#allocation4 + $0x58] sm:$0xf]
        %v339 = vld [vmem:[#allocation4 + $0x5c] sm:$0xf]
        %v340 = vld [vmem:[#allocation4 + $0x60] sm:$0xf]
        %v341 = vld [vmem:[#allocation4 + $0x64] sm:$0xf]
        %v342 = vld [vmem:[#allocation4 + $0x68] sm:$0xf]
        %v343 = vld [vmem:[#allocation4 + $0x6c] sm:$0xf]
        %v344 = vld [vmem:[#allocation4 + $0x70] sm:$0xf]
        %v345 = vld [vmem:[#allocation4 + $0x74] sm:$0xf]
        %v346 = vld [vmem:[#allocation4 + $0x78] sm:$0xf]
        %v347 = vld [vmem:[#allocation4 + $0x7c] sm:$0xf]
        %v348 = vld [vmem:[#allocation4 + $0x80] sm:$0xf]
        %v349 = vld [vmem:[#allocation4 + $0x84] sm:$0xf]
        %v350 = vld [vmem:[#allocation4 + $0x88] sm:$0xf]
        %v351 = vld [vmem:[#allocation4 + $0x8c] sm:$0xf]
        %v352 = vld [vmem:[#allocation4 + $0x90] sm:$0xf]
        %v353 = vld [vmem:[#allocation4 + $0x94] sm:$0xf]
        %v354 = vld [vmem:[#allocation4 + $0x98] sm:$0xf]
        %v355 = vld [vmem:[#allocation4 + $0x9c] sm:$0xf]
        %v356 = vld [vmem:[#allocation4 + $0xa0] sm:$0xf]
        %v357 = vld [vmem:[#allocation4 + $0xa4] sm:$0xf]
        %v358 = vld [vmem:[#allocation4 + $0xa8] sm:$0xf]
        %v359 = vld [vmem:[#allocation4 + $0xac] sm:$0xf]
        %v360 = vld [vmem:[#allocation4 + $0xb0] sm:$0xf]
        %v361 = vld [vmem:[#allocation4 + $0xb4] sm:$0xf]
        %v362 = vld [vmem:[#allocation4 + $0xb8] sm:$0xf]
        %v363 = vld [vmem:[#allocation4 + $0xbc] sm:$0xf]
        %v364 = vld [vmem:[#allocation4 + $0xc0] sm:$0xf]
        %v365 = vld [vmem:[#allocation4 + $0xc4] sm:$0xf]
        %v366 = vld [vmem:[#allocation4 + $0xc8] sm:$0xf]
        %v367 = vld [vmem:[#allocation4 + $0xcc] sm:$0xf]
        %v368 = vld [vmem:[#allocation4 + $0xd0] sm:$0xf]
        %v369 = vld [vmem:[#allocation4 + $0xd4] sm:$0xf]
        %v370 = vld [vmem:[#allocation4 + $0xd8] sm:$0xf]
        %v371 = vld [vmem:[#allocation4 + $0xdc] sm:$0xf]
        %v372 = vld [vmem:[#allocation4 + $0xe0] sm:$0xf]
        %v373 = vld [vmem:[#allocation4 + $0xe4] sm:$0xf]
        %v374 = vld [vmem:[#allocation4 + $0xe8] sm:$0xf]
        %v375 = vld [vmem:[#allocation4 + $0xec] sm:$0xf]
        %v376 = vld [vmem:[#allocation4 + $0xf0] sm:$0xf]
        %v377 = vld [vmem:[#allocation4 + $0xf4] sm:$0xf]
        %v378 = vld [vmem:[#allocation4 + $0xf8] sm:$0xf]
        %v379 = vld [vmem:[#allocation4 + $0xfc] sm:$0xf]
        %v380 = vld [vmem:[#allocation4 + $0x100] sm:$0xf]
        %v381 = vld [vmem:[#allocation4 + $0x104] sm:$0xf]
        %v382 = vld [vmem:[#allocation4 + $0x108] sm:$0xf]
        %v383 = vld [vmem:[#allocation4 + $0x10c] sm:$0xf]
        %v384 = vld [vmem:[#allocation4 + $0x110] sm:$0xf]
        %v385 = vld [vmem:[#allocation4 + $0x114] sm:$0xf]
        %v386 = vld [vmem:[#allocation4 + $0x118] sm:$0xf]
        %v387 = vld [vmem:[#allocation4 + $0x11c] sm:$0xf]
        %v388 = vld [vmem:[#allocation4 + $0x120] sm:$0xf]
        %v389 = vld [vmem:[#allocation4 + $0x124] sm:$0xf]
        %v390 = vld [vmem:[#allocation4 + $0x128] sm:$0xf]
        %v391 = vld [vmem:[#allocation4 + $0x12c] sm:$0xf]
        %v392 = vld [vmem:[#allocation4 + $0x130] sm:$0xf]
        %v393 = vld [vmem:[#allocation4 + $0x134] sm:$0xf]
        %v394 = vld [vmem:[#allocation4 + $0x138] sm:$0xf]
        %v395 = vld [vmem:[#allocation4 + $0x13c] sm:$0xf]
        %v396 = vld [vmem:[#allocation4 + $0x140] sm:$0xf]
        %v397 = vld [vmem:[#allocation4 + $0x144] sm:$0xf]
        %v398 = vld [vmem:[#allocation4 + $0x148] sm:$0xf]
        %v399 = vld [vmem:[#allocation4 + $0x14c] sm:$0xf]
        %v400 = vld [vmem:[#allocation4 + $0x150] sm:$0xf]
        %v401 = vld [vmem:[#allocation4 + $0x154] sm:$0xf]
        %v402 = vld [vmem:[#allocation4 + $0x158] sm:$0xf]
        %v403 = vld [vmem:[#allocation4 + $0x15c] sm:$0xf]
        %v404 = vld [vmem:[#allocation4 + $0x160] sm:$0xf]
        %v405 = vld [vmem:[#allocation4 + $0x164] sm:$0xf]
        %v406 = vld [vmem:[#allocation4 + $0x168] sm:$0xf]
        %v407 = vld [vmem:[#allocation4 + $0x16c] sm:$0xf]
        %v408 = vld [vmem:[#allocation4 + $0x170] sm:$0xf]
        %v409 = vld [vmem:[#allocation4 + $0x174] sm:$0xf]
        %v410 = vld [vmem:[#allocation4 + $0x178] sm:$0xf]
        %v411 = vld [vmem:[#allocation4 + $0x17c] sm:$0xf]
        %v412 = vld [vmem:[#allocation4 + $0x180] sm:$0xf]
        %v413 = vld [vmem:[#allocation4 + $0x184] sm:$0xf]
        %v414 = vld [vmem:[%s2] sm:$0x1]
        %v416 = vperm.slane %v414, 0
        %v516 = vunpack.c.l.b16 %v316
        %v517 = vunpack.c.l.b16 %v317
        %v518 = vunpack.c.l.b16 %v318
        %v519 = vunpack.c.l.b16 %v319
        %v520 = vunpack.c.l.b16 %v320
        %v521 = vunpack.c.l.b16 %v321
        %v522 = vunpack.c.l.b16 %v322
        %v523 = vunpack.c.l.b16 %v323
        %v524 = vunpack.c.l.b16 %v324
        %v525 = vunpack.c.l.b16 %v325
        %v526 = vunpack.c.l.b16 %v326
        %v527 = vunpack.c.l.b16 %v327
        %v528 = vunpack.c.l.b16 %v328
        %v529 = vunpack.c.l.b16 %v329
        %v530 = vunpack.c.l.b16 %v330
        %v531 = vunpack.c.l.b16 %v331
        %v532 = vunpack.c.l.b16 %v332
        %v533 = vunpack.c.l.b16 %v333
        %v534 = vunpack.c.l.b16 %v334
        %v535 = vunpack.c.l.b16 %v335
        %v536 = vunpack.c.l.b16 %v336
        %v537 = vunpack.c.l.b16 %v337
        %v538 = vunpack.c.l.b16 %v338
        %v539 = vunpack.c.l.b16 %v339
        %v540 = vunpack.c.l.b16 %v340
        %v541 = vunpack.c.l.b16 %v341
        %v542 = vunpack.c.l.b16 %v342
        %v543 = vunpack.c.l.b16 %v343
        %v544 = vunpack.c.l.b16 %v344
        %v545 = vunpack.c.l.b16 %v345
        %v546 = vunpack.c.l.b16 %v346
        %v547 = vunpack.c.l.b16 %v347
        %v548 = vunpack.c.l.b16 %v348
        %v549 = vunpack.c.l.b16 %v349
        %v550 = vunpack.c.l.b16 %v350
        %v551 = vunpack.c.l.b16 %v351
        %v552 = vunpack.c.l.b16 %v352
        %v553 = vunpack.c.l.b16 %v353
        %v554 = vunpack.c.l.b16 %v354
        %v555 = vunpack.c.l.b16 %v355
        %v556 = vunpack.c.l.b16 %v356
        %v557 = vunpack.c.l.b16 %v357
        %v558 = vunpack.c.l.b16 %v358
        %v559 = vunpack.c.l.b16 %v359
        %v560 = vunpack.c.l.b16 %v360
        %v561 = vunpack.c.l.b16 %v361
        %v562 = vunpack.c.l.b16 %v362
        %v563 = vunpack.c.l.b16 %v363
        %v564 = vunpack.c.l.b16 %v364
        %v565 = vunpack.c.l.b16 %v365
        %v566 = vunpack.c.l.b16 %v366
        %v567 = vunpack.c.l.b16 %v367
        %v568 = vunpack.c.l.b16 %v368
        %v569 = vunpack.c.l.b16 %v369
        %v570 = vunpack.c.l.b16 %v370
        %v571 = vunpack.c.l.b16 %v371
        %v572 = vunpack.c.l.b16 %v372
        %v573 = vunpack.c.l.b16 %v373
        %v574 = vunpack.c.l.b16 %v374
        %v575 = vunpack.c.l.b16 %v375
        %v576 = vunpack.c.l.b16 %v376
        %v577 = vunpack.c.l.b16 %v377
        %v578 = vunpack.c.l.b16 %v378
        %v579 = vunpack.c.l.b16 %v379
        %v580 = vunpack.c.l.b16 %v380
        %v581 = vunpack.c.l.b16 %v381
        %v582 = vunpack.c.l.b16 %v382
        %v583 = vunpack.c.l.b16 %v383
        %v584 = vunpack.c.l.b16 %v384
        %v585 = vunpack.c.l.b16 %v385
        %v586 = vunpack.c.l.b16 %v386
        %v587 = vunpack.c.l.b16 %v387
        %v588 = vunpack.c.l.b16 %v388
        %v589 = vunpack.c.l.b16 %v389
        %v590 = vunpack.c.l.b16 %v390
        %v591 = vunpack.c.l.b16 %v391
        %v592 = vunpack.c.l.b16 %v392
        %v593 = vunpack.c.l.b16 %v393
        %v594 = vunpack.c.l.b16 %v394
        %v595 = vunpack.c.l.b16 %v395
        %v596 = vunpack.c.l.b16 %v396
        %v597 = vunpack.c.l.b16 %v397
        %v598 = vunpack.c.l.b16 %v398
        %v599 = vunpack.c.l.b16 %v399
        %v600 = vunpack.c.l.b16 %v400
        %v601 = vunpack.c.l.b16 %v401
        %v602 = vunpack.c.l.b16 %v402
        %v603 = vunpack.c.l.b16 %v403
        %v604 = vunpack.c.l.b16 %v404
        %v605 = vunpack.c.l.b16 %v405
        %v606 = vunpack.c.l.b16 %v406
        %v607 = vunpack.c.l.b16 %v407
        %v608 = vunpack.c.l.b16 %v408
        %v609 = vunpack.c.l.b16 %v409
        %v610 = vunpack.c.l.b16 %v410
        %v611 = vunpack.c.l.b16 %v411
        %v612 = vunpack.c.l.b16 %v412
        %v613 = vunpack.c.l.b16 %v413
        %v614 = vpack.c.b16 %v517, %v516
        %v615 = vpack.c.b16 %v519, %v518
        %v616 = vpack.c.b16 %v521, %v520
        %v617 = vpack.c.b16 %v523, %v522
        %v618 = vpack.c.b16 %v525, %v524
        %v619 = vpack.c.b16 %v527, %v526
        %v620 = vpack.c.b16 %v529, %v528
        %v621 = vpack.c.b16 %v531, %v530
        %v622 = vpack.c.b16 %v533, %v532
        %v623 = vpack.c.b16 %v535, %v534
        %v624 = vpack.c.b16 %v537, %v536
        %v625 = vpack.c.b16 %v539, %v538
        %v626 = vpack.c.b16 %v541, %v540
        %v627 = vpack.c.b16 %v543, %v542
        %v628 = vpack.c.b16 %v545, %v544
        %v629 = vpack.c.b16 %v547, %v546
        %v630 = vpack.c.b16 %v549, %v548
        %v631 = vpack.c.b16 %v551, %v550
        %v632 = vpack.c.b16 %v553, %v552
        %v633 = vpack.c.b16 %v555, %v554
        %v634 = vpack.c.b16 %v557, %v556
        %v635 = vpack.c.b16 %v559, %v558
        %v636 = vpack.c.b16 %v561, %v560
        %v637 = vpack.c.b16 %v563, %v562
        %v638 = vpack.c.b16 %v565, %v564
        %v639 = vpack.c.b16 %v567, %v566
        %v640 = vpack.c.b16 %v569, %v568
        %v641 = vpack.c.b16 %v571, %v570
        %v642 = vpack.c.b16 %v573, %v572
        %v643 = vpack.c.b16 %v575, %v574
        %v644 = vpack.c.b16 %v577, %v576
        %v645 = vpack.c.b16 %v579, %v578
        %v646 = vpack.c.b16 %v581, %v580
        %v647 = vpack.c.b16 %v583, %v582
        %v648 = vpack.c.b16 %v585, %v584
        %v649 = vpack.c.b16 %v587, %v586
        %v650 = vpack.c.b16 %v589, %v588
        %v651 = vpack.c.b16 %v591, %v590
        %v652 = vpack.c.b16 %v593, %v592
        %v653 = vpack.c.b16 %v595, %v594
        %v654 = vpack.c.b16 %v597, %v596
        %v655 = vpack.c.b16 %v599, %v598
        %v656 = vpack.c.b16 %v601, %v600
        %v657 = vpack.c.b16 %v603, %v602
        %v658 = vpack.c.b16 %v605, %v604
        %v659 = vpack.c.b16 %v607, %v606
        %v660 = vpack.c.b16 %v609, %v608
        %v661 = vpack.c.b16 %v611, %v610
        %v662 = vpack.c.b16 %v613, %v612
        %vm712 = vcmask 130048
        %v714 = vsel %vm712, %v315, 0
        %716 = vmatpush.bf16.msra.mxu0 %v621
        %717 = vmatpush.bf16.msra.mxu0 %v620
        %718 = vmatpush.bf16.msra.mxu0 %v619
        %719 = vmatpush.bf16.msra.mxu0 %v618
        %720 = vmatpush.bf16.msra.mxu0 %v617
        %721 = vmatpush.bf16.msra.mxu0 %v616
        %722 = vmatpush.bf16.msra.mxu0 %v615
        %723 = vmatpush.bf16.msra.mxu0 %v614
        %724 = vmatmul.bf16.gmra.mxu0 %v309
        %v725 = vpop.f32.mrf.mxu0
        %v726 = vadd.f32 %v416, %v725
        %v727 = vpop.f32.mrf.mxu0
        %v728 = vadd.f32 %v416, %v727
        %729 = vdwg.mxu0
        %730 = vmatpush.bf16.msra.mxu0 %v629
        %731 = vmatpush.bf16.msra.mxu0 %v628
        %732 = vmatpush.bf16.msra.mxu0 %v627
        %733 = vmatpush.bf16.msra.mxu0 %v626
        %734 = vmatpush.bf16.msra.mxu0 %v625
        %735 = vmatpush.bf16.msra.mxu0 %v624
        %736 = vmatpush.bf16.msra.mxu0 %v623
        %737 = vmatpush.bf16.msra.mxu0 %v622
        %738 = vmatmul.bf16.gmra.mxu0 %v310
        %v739 = vpop.f32.mrf.mxu0
        %v740 = vadd.f32 %v726, %v739
        %v741 = vpop.f32.mrf.mxu0
        %v742 = vadd.f32 %v728, %v741
        %743 = vdwg.mxu0
        %744 = vmatpush.bf16.msra.mxu0 %v637
        %745 = vmatpush.bf16.msra.mxu0 %v636
        %746 = vmatpush.bf16.msra.mxu0 %v635
        %747 = vmatpush.bf16.msra.mxu0 %v634
        %748 = vmatpush.bf16.msra.mxu0 %v633
        %749 = vmatpush.bf16.msra.mxu0 %v632
        %750 = vmatpush.bf16.msra.mxu0 %v631
        %751 = vmatpush.bf16.msra.mxu0 %v630
        %752 = vmatmul.bf16.gmra.mxu0 %v311
        %v753 = vpop.f32.mrf.mxu0
        %v754 = vadd.f32 %v740, %v753
        %v755 = vpop.f32.mrf.mxu0
        %v756 = vadd.f32 %v742, %v755
        %757 = vdwg.mxu0
        %758 = vmatpush.bf16.msra.mxu0 %v645
        %759 = vmatpush.bf16.msra.mxu0 %v644
        %760 = vmatpush.bf16.msra.mxu0 %v643
        %761 = vmatpush.bf16.msra.mxu0 %v642
        %762 = vmatpush.bf16.msra.mxu0 %v641
        %763 = vmatpush.bf16.msra.mxu0 %v640
        %764 = vmatpush.bf16.msra.mxu0 %v639
        %765 = vmatpush.bf16.msra.mxu0 %v638
        %766 = vmatmul.bf16.gmra.mxu0 %v312
        %v767 = vpop.f32.mrf.mxu0
        %v768 = vadd.f32 %v754, %v767
        %v769 = vpop.f32.mrf.mxu0
        %v770 = vadd.f32 %v756, %v769
        %771 = vdwg.mxu0
        %772 = vmatpush.bf16.msra.mxu0 %v653
        %773 = vmatpush.bf16.msra.mxu0 %v652
        %774 = vmatpush.bf16.msra.mxu0 %v651
        %775 = vmatpush.bf16.msra.mxu0 %v650
        %776 = vmatpush.bf16.msra.mxu0 %v649
        %777 = vmatpush.bf16.msra.mxu0 %v648
        %778 = vmatpush.bf16.msra.mxu0 %v647
        %779 = vmatpush.bf16.msra.mxu0 %v646
        %780 = vmatmul.bf16.gmra.mxu0 %v313
        %v781 = vpop.f32.mrf.mxu0
        %v782 = vadd.f32 %v768, %v781
        %v783 = vpop.f32.mrf.mxu0
        %v784 = vadd.f32 %v770, %v783
        %785 = vdwg.mxu0
        %786 = vmatpush.bf16.msra.mxu0 %v661
        %787 = vmatpush.bf16.msra.mxu0 %v660
        %788 = vmatpush.bf16.msra.mxu0 %v659
        %789 = vmatpush.bf16.msra.mxu0 %v658
        %790 = vmatpush.bf16.msra.mxu0 %v657
        %791 = vmatpush.bf16.msra.mxu0 %v656
        %792 = vmatpush.bf16.msra.mxu0 %v655
        %793 = vmatpush.bf16.msra.mxu0 %v654
        %794 = vmatmul.bf16.gmra.mxu0 %v314
        %v795 = vpop.f32.mrf.mxu0
        %v796 = vadd.f32 %v782, %v795
        %v797 = vpop.f32.mrf.mxu0
        %v798 = vadd.f32 %v784, %v797
        %799 = vdwg.mxu0
        %800 = vmatpush.bf16.msra.mxu0 0
        %801 = vmatpush.bf16.msra.mxu0 0
        %802 = vmatpush.bf16.msra.mxu0 0
        %803 = vmatpush.bf16.msra.mxu0 0
        %804 = vmatpush.bf16.msra.mxu0 0
        %805 = vmatpush.bf16.msra.mxu0 0
        %806 = vmatpush.bf16.msra.mxu0 0
        %807 = vmatpush.bf16.msra.mxu0 %v662
        %808 = vmatmul.bf16.gmra.mxu0 %v714
        %v809 = vpop.f32.mrf.mxu0
        %v810 = vadd.f32 %v796, %v809
        %v811 = vpop.f32.mrf.mxu0
        %v812 = vadd.f32 %v798, %v811
        %813 = vdwg.mxu0
        %v814 = vmax.f32 %v810, 0.0
        %v815 = vmax.f32 %v812, 0.0
        %v816 = vpack.c.bf16 %v815, %v814
        %v817 = vld [vmem:[#allocation6] sm:$0xf]
        %v818 = vld [vmem:[#allocation6 + $0x4] sm:$0xf]
        %v819 = vld [vmem:[#allocation6 + $0x8] sm:$0xf]
        %v820 = vld [vmem:[#allocation6 + $0xc] sm:$0xf]
        %v821 = vld [vmem:[#allocation6 + $0x10] sm:$0xf]
        %v822 = vld [vmem:[#allocation6 + $0x14] sm:$0xf]
        %v823 = vld [vmem:[#allocation6 + $0x18] sm:$0xf]
        %v824 = vld [vmem:[#allocation6 + $0x1c] sm:$0xf]
        %v825 = vld [vmem:[#allocation6 + $0x20] sm:$0xf]
        %v826 = vld [vmem:[#allocation6 + $0x24] sm:$0xf]
        %v827 = vld [vmem:[#allocation6 + $0x28] sm:$0xf]
        %v828 = vld [vmem:[#allocation6 + $0x2c] sm:$0xf]
        %v829 = vld [vmem:[#allocation6 + $0x30] sm:$0xf]
        %v830 = vld [vmem:[#allocation6 + $0x34] sm:$0xf]
        %v831 = vld [vmem:[#allocation6 + $0x38] sm:$0xf]
        %v832 = vld [vmem:[#allocation6 + $0x3c] sm:$0xf]
        %v833 = vld [vmem:[%s4] sm:$0x1]
        %v835 = vperm.slane %v833, 0
        %v853 = vunpack.c.l.b16 %v817
        %v854 = vunpack.c.l.b16 %v818
        %v855 = vunpack.c.l.b16 %v819
        %v856 = vunpack.c.l.b16 %v820
        %v857 = vunpack.c.l.b16 %v821
        %v858 = vunpack.c.l.b16 %v822
        %v859 = vunpack.c.l.b16 %v823
        %v860 = vunpack.c.l.b16 %v824
        %v861 = vunpack.c.l.b16 %v825
        %v862 = vunpack.c.l.b16 %v826
        %v863 = vunpack.c.l.b16 %v827
        %v864 = vunpack.c.l.b16 %v828
        %v865 = vunpack.c.l.b16 %v829
        %v866 = vunpack.c.l.b16 %v830
        %v867 = vunpack.c.l.b16 %v831
        %v868 = vunpack.c.l.b16 %v832
        %v869 = vpack.c.b16 %v854, %v853
        %v870 = vpack.c.b16 %v856, %v855
        %v871 = vpack.c.b16 %v858, %v857
        %v872 = vpack.c.b16 %v860, %v859
        %v873 = vpack.c.b16 %v862, %v861
        %v874 = vpack.c.b16 %v864, %v863
        %v875 = vpack.c.b16 %v866, %v865
        %v876 = vpack.c.b16 %v868, %v867
        %885 = vmatpush.bf16.msra.mxu0 %v876
        %886 = vmatpush.bf16.msra.mxu0 %v875
        %887 = vmatpush.bf16.msra.mxu0 %v874
        %888 = vmatpush.bf16.msra.mxu0 %v873
        %889 = vmatpush.bf16.msra.mxu0 %v872
        %890 = vmatpush.bf16.msra.mxu0 %v871
        %891 = vmatpush.bf16.msra.mxu0 %v870
        %892 = vmatpush.bf16.msra.mxu0 %v869
        %893 = vmatmul.bf16.gmra.mxu0 %v816
        %v894 = vpop.f32.mrf.mxu0
        %v895 = vadd.f32 %v835, %v894
        %v896 = vpop.f32.mrf.mxu0
        %v897 = vadd.f32 %v835, %v896
        %898 = vdwg.mxu0
        %899 = vmax.xlane.f32.xlu0 %v895
        %v900 = vpop.xlane.xlu0 %899
        %901 = vmax.xlane.f32.xlu0 %v897
        %v902 = vpop.xlane.xlu0 %901
        %v903 = vsub.f32 %v895, %v900
        %v904 = vsub.f32 %v897, %v902
        %v905 = vmul.f32 %v903, 1.442695
        %v906 = vpow.pop %v905
        %v907 = vmul.f32 %v904, 1.442695
        %v908 = vpow.pop %v907
        %909 = vadd.xlane.f32.xlu0 %v906
        %v910 = vpop.xlane.xlu0 %909
        %911 = vadd.xlane.f32.xlu0 %v908
        %v912 = vpop.xlane.xlu0 %911
        %v913 = vrcp.pop %v910
        %v914 = vrcp.pop %v912
        %v915 = vmul.f32 %v906, %v913
        %v916 = vmul.f32 %v908, %v914
        %vm917 = vcmask 15360
        %918 = vst.msk [vmem:[%s282] sm:$0xff] %vm917, %v915
        %919 = vst.msk [vmem:[%s282 + $0x8] sm:$0xff] %vm917, %v916
        %s920 = sand.u32 %s138, 1
        %s921 = sand.u32 %s138, 1
        %s922 = smul.addr %s921, 16
        %s923 = scalar_lea.vmem [#allocation7], %s922
        // Predicated region
        $region53: #{tpu_custom_call.1} parent=39 // pred_check
          %p924 = pneg %p148
        $region54: #{tpu_custom_call.1} parent=39 // pred_check_branch
          %926 = sbr.rel (%p924) target = $region56
        $region55: #{tpu_custom_call.1} parent=39 // pred_region
          %s927 = smul.u32 2, %s20
          %s928 = ssub.s32 5, %s927
          %p929 = scmp.lt.s32.totalorder %s928, 2
          %s930 = scalar_select %p929, %s928, 2
          %s931 = smul.u32 8, %s930
          %p932 = scmp.ne.s32.totalorder 0, %s931
          %s933 = smul.addr %s927, 8
          %s934 = scalar_lea.vmem %s5, %s933
          // Predicated region
          $region57: #{tpu_custom_call.1} parent=55 // pred_check
            %p935 = pneg %p932
          $region58: #{tpu_custom_call.1} parent=55 // pred_check_branch
            %937 = sbr.rel (%p935) target = $region60
          $region59: #{tpu_custom_call.1} parent=55 // pred_region
            // Predicated region
            $region61: #{tpu_custom_call.1} parent=59 // pred_check
              _
            $region62: #{tpu_custom_call.1} parent=59 // pred_check_branch
              %939 = sbr.rel (0) target = $region64
            $region63: #{tpu_custom_call.1} parent=59 // pred_region
              // Predicated region
              $region83: #{tpu_custom_call.1} parent=63 // pred_check
                _
              $region84: #{tpu_custom_call.1} parent=63 // pred_check_branch
                %991 = sbr.rel (0) target = $region86
              $region85: #{tpu_custom_call.1} parent=63 // pred_region
                %s992 = sshrl.u32 %s930, 1
                // While loop
                $region87: #{tpu_custom_call.1} parent=85 // loop_pre_header
                  _
                $region88: #{tpu_custom_call.1} parent=85 // loop_header
                  %s994 = sphi 0, %s996
                  %p995 = scmp.ge.s32.totalorder %s994, %s992
                  %s999 = sphi 0, %s1008
                  %s1000 = sphi %s923, %s1011
                  %s1001 = sphi %s934, %s1012
                $region89: #{tpu_custom_call.1} parent=85 // loop_header_branch
                  %998 = sbr.rel (%p995) target = $region93
                $region90: #{tpu_custom_call.1} parent=85 // loop_body
                  %v1002 = vld [vmem:[%s1000] sm:$0xff]
                  %1003 = vst [vmem:[%s1001] sm:$0xff] %v1002
                  %v1004 = vld [vmem:[%s1000 + $0x8] sm:$0xff]
                  %1005 = vst [vmem:[%s1001 + $0x8] sm:$0xff] %v1004
                  %s1006 = sadd.s32 1, %s999
                  %p1007 = scmp.ge.s32.totalorder %s1006, %s992
                  %s1008 = scalar_select %p1007, 0, %s1006
                  %s1009 = smul.u32 %s1008, 16
                  %s1010 = smul.u32 %s1008, 16
                  %s1011 = scalar_lea.vmem %s923, %s1009 [#allocation7]
                  %s1012 = scalar_lea.vmem %s934, %s1010
                $region91: #{tpu_custom_call.1} parent=85 // loop_footer
                  %s996 = sadd.s32 %s994, 1
                $region92: #{tpu_custom_call.1} parent=85 // loop_footer_branch
                  %993 = sbr.rel target = $region88
                $region93: #{tpu_custom_call.1} parent=85 // loop_exit
                  _
                %s1013 = sshrl.u32 %s930, 1
                %s1014 = sand.u32 %s930, 1
                %s1015 = smul.u32 %s1013, 2
                %s1016 = smul.u32 8, %s1015
                %s1017 = scalar_lea.vmem %s923, %s1016 [#allocation7]
                %s1018 = smul.u32 8, %s1015
                %s1019 = scalar_lea.vmem %s934, %s1018
                // While loop
                $region94: #{tpu_custom_call.1} parent=85 // loop_pre_header
                  _
                $region95: #{tpu_custom_call.1} parent=85 // loop_header
                  %s1021 = sphi 0, %s1023
                  %p1022 = scmp.ge.s32.totalorder %s1021, %s1014
                  %s1026 = sphi 0, %s1033
                  %s1027 = sphi %s1017, %s1036
                  %s1028 = sphi %s1019, %s1037
                $region96: #{tpu_custom_call.1} parent=85 // loop_header_branch
                  %1025 = sbr.rel (%p1022) target = $region100
                $region97: #{tpu_custom_call.1} parent=85 // loop_body
                  %v1029 = vld [vmem:[%s1027] sm:$0xff]
                  %1030 = vst [vmem:[%s1028] sm:$0xff] %v1029
                  %s1031 = sadd.s32 1, %s1026
                  %p1032 = scmp.ge.s32.totalorder %s1031, %s1014
                  %s1033 = scalar_select %p1032, 0, %s1031
                  %s1034 = smul.u32 %s1033, 8
                  %s1035 = smul.u32 %s1033, 8
                  %s1036 = scalar_lea.vmem %s1017, %s1034 [#allocation7]
                  %s1037 = scalar_lea.vmem %s1019, %s1035
                $region98: #{tpu_custom_call.1} parent=85 // loop_footer
                  %s1023 = sadd.s32 %s1021, 1
                $region99: #{tpu_custom_call.1} parent=85 // loop_footer_branch
                  %1020 = sbr.rel target = $region95
                $region100: #{tpu_custom_call.1} parent=85 // loop_exit
                  _
              $region86: #{tpu_custom_call.1} parent=63 // pred_fallthru
                _
              // Predicated region
              $region101: #{tpu_custom_call.1} parent=63 // pred_check
                _
              $region102: #{tpu_custom_call.1} parent=63 // pred_check_branch
                %1039 = sbr.rel target = $region104
              $region103: #{tpu_custom_call.1} parent=63 // pred_region
                _
              $region104: #{tpu_custom_call.1} parent=63 // pred_fallthru
                _
            $region64: #{tpu_custom_call.1} parent=59 // pred_fallthru
              _
            // Predicated region
            $region65: #{tpu_custom_call.1} parent=59 // pred_check
              _
            $region66: #{tpu_custom_call.1} parent=59 // pred_check_branch
              %941 = sbr.rel target = $region68
            $region67: #{tpu_custom_call.1} parent=59 // pred_region
              %s943 = ssub.s32 256, 1
              %s944 = sshrl.u32 %s930, 1
              // While loop
              $region69: #{tpu_custom_call.1} parent=67 // loop_pre_header
                _
              $region70: #{tpu_custom_call.1} parent=67 // loop_header
                %s946 = sphi 0, %s948
                %p947 = scmp.ge.s32.totalorder %s946, %s944
                %s951 = sphi 0, %s960
                %s952 = sphi %s923, %s963
                %s953 = sphi %s934, %s964
              $region71: #{tpu_custom_call.1} parent=67 // loop_header_branch
                %950 = sbr.rel (%p947) target = $region75
              $region72: #{tpu_custom_call.1} parent=67 // loop_body
                %v954 = vld [vmem:[%s952] sm:%s943]
                %955 = vst [vmem:[%s953] sm:%s943] %v954
                %v956 = vld [vmem:[%s952 + $0x8] sm:%s943]
                %957 = vst [vmem:[%s953 + $0x8] sm:%s943] %v956
                %s958 = sadd.s32 1, %s951
                %p959 = scmp.ge.s32.totalorder %s958, %s944
                %s960 = scalar_select %p959, 0, %s958
                %s961 = smul.u32 %s960, 16
                %s962 = smul.u32 %s960, 16
                %s963 = scalar_lea.vmem %s923, %s961 [#allocation7]
                %s964 = scalar_lea.vmem %s934, %s962
              $region73: #{tpu_custom_call.1} parent=67 // loop_footer
                %s948 = sadd.s32 %s946, 1
              $region74: #{tpu_custom_call.1} parent=67 // loop_footer_branch
                %945 = sbr.rel target = $region70
              $region75: #{tpu_custom_call.1} parent=67 // loop_exit
                _
              %s965 = sshrl.u32 %s930, 1
              %s966 = sand.u32 %s930, 1
              %s967 = smul.u32 %s965, 2
              %s968 = smul.u32 8, %s967
              %s969 = scalar_lea.vmem %s923, %s968 [#allocation7]
              %s970 = smul.u32 8, %s967
              %s971 = scalar_lea.vmem %s934, %s970
              // While loop
              $region76: #{tpu_custom_call.1} parent=67 // loop_pre_header
                _
              $region77: #{tpu_custom_call.1} parent=67 // loop_header
                %s973 = sphi 0, %s975
                %p974 = scmp.ge.s32.totalorder %s973, %s966
                %s978 = sphi 0, %s985
                %s979 = sphi %s969, %s988
                %s980 = sphi %s971, %s989
              $region78: #{tpu_custom_call.1} parent=67 // loop_header_branch
                %977 = sbr.rel (%p974) target = $region82
              $region79: #{tpu_custom_call.1} parent=67 // loop_body
                %v981 = vld [vmem:[%s979] sm:%s943]
                %982 = vst [vmem:[%s980] sm:%s943] %v981
                %s983 = sadd.s32 1, %s978
                %p984 = scmp.ge.s32.totalorder %s983, %s966
                %s985 = scalar_select %p984, 0, %s983
                %s986 = smul.u32 %s985, 8
                %s987 = smul.u32 %s985, 8
                %s988 = scalar_lea.vmem %s969, %s986 [#allocation7]
                %s989 = scalar_lea.vmem %s971, %s987
              $region80: #{tpu_custom_call.1} parent=67 // loop_footer
                %s975 = sadd.s32 %s973, 1
              $region81: #{tpu_custom_call.1} parent=67 // loop_footer_branch
                %972 = sbr.rel target = $region77
              $region82: #{tpu_custom_call.1} parent=67 // loop_exit
                _
            $region68: #{tpu_custom_call.1} parent=59 // pred_fallthru
              _
          $region60: #{tpu_custom_call.1} parent=55 // pred_fallthru
            _
          %1040 = vnop
        $region56: #{tpu_custom_call.1} parent=39 // pred_fallthru
          _
      $region40: #{tpu_custom_call.1} parent=5 // pred_fallthru
        _
      %p1041 = scmp.le.s32.totalorder 2, %s15
      // Predicated region
      $region105: #{tpu_custom_call.1} parent=5 // pred_check
        %p1042 = pneg %p1041
      $region106: #{tpu_custom_call.1} parent=5 // pred_check_branch
        %1044 = sbr.rel (%p1042) target = $region108
      $region107: #{tpu_custom_call.1} parent=5 // pred_region
        %s1045 = ssub.s32 %s15, 2
        // Predicated region
        $region109: #{tpu_custom_call.1} parent=107 // pred_check
          %p1046 = pneg %p154
        $region110: #{tpu_custom_call.1} parent=107 // pred_check_branch
          %1048 = sbr.rel (%p1046) target = $region112
        $region111: #{tpu_custom_call.1} parent=107 // pred_region
          %s1049 = sand.u32 %s139, 1
          %s1050 = sand.u32 %s139, 1
          %s1051 = smul.addr %s1050, 16
          %s1052 = scalar_lea.vmem [#allocation7], %s1051
        $region112: #{tpu_custom_call.1} parent=107 // pred_fallthru
          _
      $region108: #{tpu_custom_call.1} parent=5 // pred_fallthru
        _
    $region6: #{tpu_custom_call.1} parent=1 // loop_footer
      %s19 = sadd.s32 1, %s15
    $region7: #{tpu_custom_call.1} parent=1 // loop_footer_branch
      %14 = sbr.rel target = $region3
    $region8: #{tpu_custom_call.1} parent=1 // loop_exit
      _
    %1053 = vsyncpa [#allocation3], 1
    %s1054 = scalar_lea.sflag [#allocation3], 1
    %1055 = vsyncpa %s1054, 1
    %1056 = vsyncpa [#allocation5], 1

</llo_original>
